<compile_context>
chip_gen: v5e
topology: v5e:2x2
jax: 0.10.0
libtpu: 0.0.40
codegen_flags: <defaults>
</compile_context>

<pallas_src>
import jax
import jax.numpy as jnp
from jax.experimental import pallas as pl
from jax.experimental.pallas import tpu as pltpu


def _round_up(x, m):
    return (x + m - 1) // m * m


# ---------------------------------------------------------------------------
# Kernels: HBM row-gather DMA path (tables stay in HBM, memory_space=pl.ANY)
# ---------------------------------------------------------------------------
def _dma_kernel(tok_sref, emb_hbm, o_ref, sem):
    r_rows = o_ref.shape[0]
    b = pl.program_id(1)
    s0 = pl.program_id(0) * r_rows
    # Fully unrolled issue loop: one row DMA per output row, straight into
    # the output block (no staging scratch).
    for r in range(r_rows):
        t = tok_sref[b, s0 + r]
        pltpu.make_async_copy(emb_hbm.at[pl.ds(t, 1)],
                              o_ref.at[pl.ds(r, 1)],
                              sem.at[0]).start()
    # Single wait covering all r_rows rows: DMA semaphores count bytes and
    # every row copy is the same size, so this drains exactly what was issued.
    pltpu.make_async_copy(emb_hbm.at[pl.ds(0, r_rows)], o_ref, sem.at[0]).wait()


def _dma_pos_kernel(tok_sref, emb_hbm, pos_ref, o_ref, sem):
    r_rows = o_ref.shape[0]
    b = pl.program_id(1)
    s0 = pl.program_id(0) * r_rows
    for r in range(r_rows):
        t = tok_sref[b, s0 + r]
        pltpu.make_async_copy(emb_hbm.at[pl.ds(t, 1)],
                              o_ref.at[pl.ds(r, 1)],
                              sem.at[0]).start()
    pltpu.make_async_copy(emb_hbm.at[pl.ds(0, r_rows)], o_ref, sem.at[0]).wait()
    o_ref[...] = o_ref[...] + pos_ref[...]


# ---------------------------------------------------------------------------
# Kernels: small-table fast path (table VMEM-resident, no DMA descriptors)
# ---------------------------------------------------------------------------
def _resident_kernel(tok_sref, emb_ref, o_ref):
    r_rows = o_ref.shape[0]
    b = pl.program_id(1)
    s0 = pl.program_id(0) * r_rows
    for r in range(r_rows):
        t = tok_sref[b, s0 + r]
        o_ref[pl.ds(r, 1), :] = emb_ref[pl.ds(t, 1), :]


def _resident_pos_kernel(tok_sref, emb_ref, pos_ref, o_ref):
    r_rows = o_ref.shape[0]
    b = pl.program_id(1)
    s0 = pl.program_id(0) * r_rows
    for r in range(r_rows):
        t = tok_sref[b, s0 + r]
        o_ref[pl.ds(r, 1), :] = (emb_ref[pl.ds(t, 1), :]
                                 + pos_ref[pl.ds(r, 1), :])


# ---------------------------------------------------------------------------
# Wrapper
# ---------------------------------------------------------------------------
def _pick_row_tile(S, B, H, itemsize, v_cap=None, budget_bytes=8 << 20):
    # Per-tile VMEM ~= double-buffered output block + double-buffered pos block.
    per_row = 4 * H * itemsize
    r = int(budget_bytes // per_row)
    r = max(8, min(256, (r // 8) * 8))
    r = min(r, _round_up(S, 8))
    if v_cap is not None and v_cap >= 8:
        # Keep the single-wait source slice emb[0:R] shape-valid (DMA path).
        r = min(r, (v_cap // 8) * 8)
    if B == 1 and S > 8:
        # Keep >= 2 grid steps so v7x's two TensorCores both get work.
        r = min(r, _round_up((S + 1) // 2, 8))
    return max(8, r)


def embed_wrapper_forward(inp, embed_table, pos_table=None, *,
                          small_table_bytes=4 << 20):
    """Pallas equivalent of EmbedWrapper.forward.

    inp:          int token ids, shape (S,) or (B, S)
    embed_table:  (V, H)
    pos_table:    optional (P, H) -- indexed with batch row 0's token ids and
                  broadcast over B (matches the PyTorch module).
    returns:      (B, S, H) (B == 1 when inp is 1-D), dtype of embed_table.
    """
    inp2d = inp[None, :] if inp.ndim == 1 else inp
    B, S = inp2d.shape
    V, H = embed_table.shape
    dtype = embed_table.dtype
    itemsize = dtype.itemsize

    has_pos = pos_table is not None
    use_resident = (V * H * itemsize) <= small_table_bytes

    r_rows = _pick_row_tile(S, B, H, itemsize,
                            v_cap=None if use_resident else V)
    s_pad = _round_up(S, r_rows)
    grid = (s_pad // r_rows, B)

    # TODO(synk): PyTorch's nn.Embedding raises on out-of-range ids; we clamp.
    tok = jnp.clip(inp2d.astype(jnp.int32), 0, V - 1)
    tok = jnp.pad(tok, ((0, 0), (0, s_pad - S)))   # padded tail rows fetch row 0

    in_specs = [pl.BlockSpec((V, H), lambda s, b, *_: (0, 0)) if use_resident
                else pl.BlockSpec(memory_space=pl.ANY)]
    operands = [embed_table]

    if has_pos:
        P, Hp = pos_table.shape
        assert Hp == H, "pos_embed hidden size must match embed hidden size"
        # The module looks up pos_embed with batch row 0's ids and broadcasts
        # over B: gather those S rows once here and reuse them for every batch
        # row (B is the innermost grid axis, so the pos block is not refetched).
        pos_ids = jnp.clip(inp2d[0].astype(jnp.int32), 0, P - 1)
        pos_rows = jnp.take(pos_table, pos_ids, axis=0).astype(dtype)   # (S, H)
        pos_rows = jnp.pad(pos_rows, ((0, s_pad - S), (0, 0)))
        in_specs.append(pl.BlockSpec((r_rows, H), lambda s, b, *_: (s, 0)))
        operands.append(pos_rows)

    if use_resident:
        kernel = _resident_pos_kernel if has_pos else _resident_kernel
        scratch = []
    else:
        kernel = _dma_pos_kernel if has_pos else _dma_kernel
        scratch = [pltpu.SemaphoreType.DMA((1,))]

    out = pl.pallas_call(
        kernel,
        out_shape=jax.ShapeDtypeStruct((B, s_pad, H), dtype),
        grid_spec=pltpu.PrefetchScalarGridSpec(
            num_scalar_prefetch=1,
            grid=grid,
            in_specs=in_specs,
            out_specs=pl.BlockSpec((None, r_rows, H),
                                   lambda s, b, *_: (b, s, 0)),
            scratch_shapes=scratch),
        compiler_params=pltpu.CompilerParams(
            dimension_semantics=("parallel", "parallel"),
            vmem_limit_bytes=32 * 1024 * 1024),
    )(tok, *operands)
    return out[:, :S, :]


if __name__ == "__main__":
    B, S, V, H = 2, 8, 64, 128

    key = jax.random.PRNGKey(0)
    k_tok, k_emb, k_pos = jax.random.split(key, 3)

    embed_table = (0.02 * jax.random.normal(k_emb, (V, H))).astype(jnp.float32)
    pos_table = (0.02 * jax.random.normal(k_pos, (V, H))).astype(jnp.float32)
    inp = jax.random.randint(k_tok, (B, S), 0, V, dtype=jnp.int32)

    ref = jnp.take(embed_table, inp, axis=0) + jnp.take(pos_table, inp[0], axis=0)[None]
    ref_np = jnp.take(embed_table, inp, axis=0)
    ref1d = (jnp.take(embed_table, inp[0], axis=0)
             + jnp.take(pos_table, inp[0], axis=0))[None]

    # Small-table (VMEM-resident) fast path, 2-D input + positional embedding.
    out = jax.block_until_ready(embed_wrapper_forward(inp, embed_table, pos_table))
    assert out.shape == (B, S, H)
    assert jnp.allclose(out, ref, atol=1e-6), "mismatch (resident, 2-D + pos)"

    # HBM row-gather DMA path (forced), 2-D input + positional embedding.
    out_dma = jax.block_until_ready(
        embed_wrapper_forward(inp, embed_table, pos_table, small_table_bytes=0))
    assert jnp.allclose(out_dma, ref, atol=1e-6), "mismatch (DMA gather, 2-D + pos)"

    # 1-D input branch (unsqueeze semantics).
    out1d = jax.block_until_ready(embed_wrapper_forward(inp[0], embed_table, pos_table))
    assert out1d.shape == (1, S, H)
    assert jnp.allclose(out1d, ref1d, atol=1e-6), "mismatch (1-D + pos)"

    # No positional embedding, both paths.
    out_np = jax.block_until_ready(embed_wrapper_forward(inp, embed_table, None))
    assert out_np.shape == (B, S, H)
    assert jnp.allclose(out_np, ref_np, atol=1e-6), "mismatch (resident, no pos)"

    out_np_dma = jax.block_until_ready(
        embed_wrapper_forward(inp, embed_table, None, small_table_bytes=0))
    assert jnp.allclose(out_np_dma, ref_np, atol=1e-6), "mismatch (DMA gather, no pos)"

    print("KERNEL_OK")
</pallas_src>

<mosaic_0001>
module attributes {stable_mosaic.version = 11 : i64} {
  func.func @_resident_pos_kernel(%arg0: i32, %arg1: i32, %arg2: memref<2x8xi32, #tpu.memory_space<smem>>, %arg3: memref<64x128xf32, #tpu.memory_space<vmem>>, %arg4: memref<8x128xf32, #tpu.memory_space<vmem>>, %arg5: memref<1x8x128xf32, #tpu.memory_space<vmem>>) attributes {dimension_semantics = [#tpu.dimension_semantics<parallel>, #tpu.dimension_semantics<parallel>], iteration_bounds = array<i64: 1, 2>, scalar_prefetch = 1 : i64, scratch_operands = 0 : i64, tpu.core_type = #tpu.core_type<tc>, window_params = [{pipeline_mode = #tpu.pipeline_mode<synchronous>, transform_indices = @transform_0, window_bounds = array<i64: 64, 128>}, {transform_indices = @transform_1, window_bounds = array<i64: 8, 128>}, {transform_indices = @transform_2, window_bounds = array<i64: 1, 8, 128>}]} {
    %c8_i32 = arith.constant 8 : i32
    %0 = arith.muli %arg0, %c8_i32 : i32
    %c0_i32 = arith.constant 0 : i32
    %1 = arith.addi %0, %c0_i32 : i32
    %2 = arith.index_cast %arg1 : i32 to index
    %3 = arith.index_cast %1 : i32 to index
    %4 = memref.load %arg2[%2, %3] : memref<2x8xi32, #tpu.memory_space<smem>>
    %5 = arith.index_cast %4 : i32 to index
    %c0 = arith.constant 0 : index
    %6 = vector.load %arg3[%5, %c0] : memref<64x128xf32, #tpu.memory_space<vmem>>, vector<1x128xf32>
    %c0_0 = arith.constant 0 : index
    %c0_1 = arith.constant 0 : index
    %7 = vector.load %arg4[%c0_0, %c0_1] : memref<8x128xf32, #tpu.memory_space<vmem>>, vector<1x128xf32>
    %8 = arith.addf %6, %7 : vector<1x128xf32>
    %c0_2 = arith.constant 0 : index
    %c0_3 = arith.constant 0 : index
    %c0_4 = arith.constant 0 : index
    %9 = vector.load %arg5[%c0_2, %c0_3, %c0_4] : memref<1x8x128xf32, #tpu.memory_space<vmem>>, vector<1x1x128xf32>
    %10 = vector.shape_cast %9 : vector<1x1x128xf32> to vector<1x128xf32>
    %11 = vector.shape_cast %8 : vector<1x128xf32> to vector<1x1x128xf32>
    tpu.vector_store %arg5[%c0_2, %c0_3, %c0_4], %11 {strides = array<i32>} : memref<1x8x128xf32, #tpu.memory_space<vmem>>, vector<1x1x128xf32>,
    %c1_i32 = arith.constant 1 : i32
    %12 = arith.addi %0, %c1_i32 : i32
    %13 = arith.index_cast %arg1 : i32 to index
    %14 = arith.index_cast %12 : i32 to index
    %15 = memref.load %arg2[%13, %14] : memref<2x8xi32, #tpu.memory_space<smem>>
    %16 = arith.index_cast %15 : i32 to index
    %c0_5 = arith.constant 0 : index
    %17 = vector.load %arg3[%16, %c0_5] : memref<64x128xf32, #tpu.memory_space<vmem>>, vector<1x128xf32>
    %c1 = arith.constant 1 : index
    %c0_6 = arith.constant 0 : index
    %18 = vector.load %arg4[%c1, %c0_6] : memref<8x128xf32, #tpu.memory_space<vmem>>, vector<1x128xf32>
    %19 = arith.addf %17, %18 : vector<1x128xf32>
    %c0_7 = arith.constant 0 : index
    %c1_8 = arith.constant 1 : index
    %c0_9 = arith.constant 0 : index
    %20 = vector.load %arg5[%c0_7, %c1_8, %c0_9] : memref<1x8x128xf32, #tpu.memory_space<vmem>>, vector<1x1x128xf32>
    %21 = vector.shape_cast %20 : vector<1x1x128xf32> to vector<1x128xf32>
    %22 = vector.shape_cast %19 : vector<1x128xf32> to vector<1x1x128xf32>
    tpu.vector_store %arg5[%c0_7, %c1_8, %c0_9], %22 {strides = array<i32>} : memref<1x8x128xf32, #tpu.memory_space<vmem>>, vector<1x1x128xf32>,
    %c2_i32 = arith.constant 2 : i32
    %23 = arith.addi %0, %c2_i32 : i32
    %24 = arith.index_cast %arg1 : i32 to index
    %25 = arith.index_cast %23 : i32 to index
    %26 = memref.load %arg2[%24, %25] : memref<2x8xi32, #tpu.memory_space<smem>>
    %27 = arith.index_cast %26 : i32 to index
    %c0_10 = arith.constant 0 : index
    %28 = vector.load %arg3[%27, %c0_10] : memref<64x128xf32, #tpu.memory_space<vmem>>, vector<1x128xf32>
    %c2 = arith.constant 2 : index
    %c0_11 = arith.constant 0 : index
    %29 = vector.load %arg4[%c2, %c0_11] : memref<8x128xf32, #tpu.memory_space<vmem>>, vector<1x128xf32>
    %30 = arith.addf %28, %29 : vector<1x128xf32>
    %c0_12 = arith.constant 0 : index
    %c2_13 = arith.constant 2 : index
    %c0_14 = arith.constant 0 : index
    %31 = vector.load %arg5[%c0_12, %c2_13, %c0_14] : memref<1x8x128xf32, #tpu.memory_space<vmem>>, vector<1x1x128xf32>
    %32 = vector.shape_cast %31 : vector<1x1x128xf32> to vector<1x128xf32>
    %33 = vector.shape_cast %30 : vector<1x128xf32> to vector<1x1x128xf32>
    tpu.vector_store %arg5[%c0_12, %c2_13, %c0_14], %33 {strides = array<i32>} : memref<1x8x128xf32, #tpu.memory_space<vmem>>, vector<1x1x128xf32>,
    %c3_i32 = arith.constant 3 : i32
    %34 = arith.addi %0, %c3_i32 : i32
    %35 = arith.index_cast %arg1 : i32 to index
    %36 = arith.index_cast %34 : i32 to index
    %37 = memref.load %arg2[%35, %36] : memref<2x8xi32, #tpu.memory_space<smem>>
    %38 = arith.index_cast %37 : i32 to index
    %c0_15 = arith.constant 0 : index
    %39 = vector.load %arg3[%38, %c0_15] : memref<64x128xf32, #tpu.memory_space<vmem>>, vector<1x128xf32>
    %c3 = arith.constant 3 : index
    %c0_16 = arith.constant 0 : index
    %40 = vector.load %arg4[%c3, %c0_16] : memref<8x128xf32, #tpu.memory_space<vmem>>, vector<1x128xf32>
    %41 = arith.addf %39, %40 : vector<1x128xf32>
    %c0_17 = arith.constant 0 : index
    %c3_18 = arith.constant 3 : index
    %c0_19 = arith.constant 0 : index
    %42 = vector.load %arg5[%c0_17, %c3_18, %c0_19] : memref<1x8x128xf32, #tpu.memory_space<vmem>>, vector<1x1x128xf32>
    %43 = vector.shape_cast %42 : vector<1x1x128xf32> to vector<1x128xf32>
    %44 = vector.shape_cast %41 : vector<1x128xf32> to vector<1x1x128xf32>
    tpu.vector_store %arg5[%c0_17, %c3_18, %c0_19], %44 {strides = array<i32>} : memref<1x8x128xf32, #tpu.memory_space<vmem>>, vector<1x1x128xf32>,
    %c4_i32 = arith.constant 4 : i32
    %45 = arith.addi %0, %c4_i32 : i32
    %46 = arith.index_cast %arg1 : i32 to index
    %47 = arith.index_cast %45 : i32 to index
    %48 = memref.load %arg2[%46, %47] : memref<2x8xi32, #tpu.memory_space<smem>>
    %49 = arith.index_cast %48 : i32 to index
    %c0_20 = arith.constant 0 : index
    %50 = vector.load %arg3[%49, %c0_20] : memref<64x128xf32, #tpu.memory_space<vmem>>, vector<1x128xf32>
    %c4 = arith.constant 4 : index
    %c0_21 = arith.constant 0 : index
    %51 = vector.load %arg4[%c4, %c0_21] : memref<8x128xf32, #tpu.memory_space<vmem>>, vector<1x128xf32>
    %52 = arith.addf %50, %51 : vector<1x128xf32>
    %c0_22 = arith.constant 0 : index
    %c4_23 = arith.constant 4 : index
    %c0_24 = arith.constant 0 : index
    %53 = vector.load %arg5[%c0_22, %c4_23, %c0_24] : memref<1x8x128xf32, #tpu.memory_space<vmem>>, vector<1x1x128xf32>
    %54 = vector.shape_cast %53 : vector<1x1x128xf32> to vector<1x128xf32>
    %55 = vector.shape_cast %52 : vector<1x128xf32> to vector<1x1x128xf32>
    tpu.vector_store %arg5[%c0_22, %c4_23, %c0_24], %55 {strides = array<i32>} : memref<1x8x128xf32, #tpu.memory_space<vmem>>, vector<1x1x128xf32>,
    %c5_i32 = arith.constant 5 : i32
    %56 = arith.addi %0, %c5_i32 : i32
    %57 = arith.index_cast %arg1 : i32 to index
    %58 = arith.index_cast %56 : i32 to index
    %59 = memref.load %arg2[%57, %58] : memref<2x8xi32, #tpu.memory_space<smem>>
    %60 = arith.index_cast %59 : i32 to index
    %c0_25 = arith.constant 0 : index
    %61 = vector.load %arg3[%60, %c0_25] : memref<64x128xf32, #tpu.memory_space<vmem>>, vector<1x128xf32>
    %c5 = arith.constant 5 : index
    %c0_26 = arith.constant 0 : index
    %62 = vector.load %arg4[%c5, %c0_26] : memref<8x128xf32, #tpu.memory_space<vmem>>, vector<1x128xf32>
    %63 = arith.addf %61, %62 : vector<1x128xf32>
    %c0_27 = arith.constant 0 : index
    %c5_28 = arith.constant 5 : index
    %c0_29 = arith.constant 0 : index
    %64 = vector.load %arg5[%c0_27, %c5_28, %c0_29] : memref<1x8x128xf32, #tpu.memory_space<vmem>>, vector<1x1x128xf32>
    %65 = vector.shape_cast %64 : vector<1x1x128xf32> to vector<1x128xf32>
    %66 = vector.shape_cast %63 : vector<1x128xf32> to vector<1x1x128xf32>
    tpu.vector_store %arg5[%c0_27, %c5_28, %c0_29], %66 {strides = array<i32>} : memref<1x8x128xf32, #tpu.memory_space<vmem>>, vector<1x1x128xf32>,
    %c6_i32 = arith.constant 6 : i32
    %67 = arith.addi %0, %c6_i32 : i32
    %68 = arith.index_cast %arg1 : i32 to index
    %69 = arith.index_cast %67 : i32 to index
    %70 = memref.load %arg2[%68, %69] : memref<2x8xi32, #tpu.memory_space<smem>>
    %71 = arith.index_cast %70 : i32 to index
    %c0_30 = arith.constant 0 : index
    %72 = vector.load %arg3[%71, %c0_30] : memref<64x128xf32, #tpu.memory_space<vmem>>, vector<1x128xf32>
    %c6 = arith.constant 6 : index
    %c0_31 = arith.constant 0 : index
    %73 = vector.load %arg4[%c6, %c0_31] : memref<8x128xf32, #tpu.memory_space<vmem>>, vector<1x128xf32>
    %74 = arith.addf %72, %73 : vector<1x128xf32>
    %c0_32 = arith.constant 0 : index
    %c6_33 = arith.constant 6 : index
    %c0_34 = arith.constant 0 : index
    %75 = vector.load %arg5[%c0_32, %c6_33, %c0_34] : memref<1x8x128xf32, #tpu.memory_space<vmem>>, vector<1x1x128xf32>
    %76 = vector.shape_cast %75 : vector<1x1x128xf32> to vector<1x128xf32>
    %77 = vector.shape_cast %74 : vector<1x128xf32> to vector<1x1x128xf32>
    tpu.vector_store %arg5[%c0_32, %c6_33, %c0_34], %77 {strides = array<i32>} : memref<1x8x128xf32, #tpu.memory_space<vmem>>, vector<1x1x128xf32>,
    %c7_i32 = arith.constant 7 : i32
    %78 = arith.addi %0, %c7_i32 : i32
    %79 = arith.index_cast %arg1 : i32 to index
    %80 = arith.index_cast %78 : i32 to index
    %81 = memref.load %arg2[%79, %80] : memref<2x8xi32, #tpu.memory_space<smem>>
    %82 = arith.index_cast %81 : i32 to index
    %c0_35 = arith.constant 0 : index
    %83 = vector.load %arg3[%82, %c0_35] : memref<64x128xf32, #tpu.memory_space<vmem>>, vector<1x128xf32>
    %c7 = arith.constant 7 : index
    %c0_36 = arith.constant 0 : index
    %84 = vector.load %arg4[%c7, %c0_36] : memref<8x128xf32, #tpu.memory_space<vmem>>, vector<1x128xf32>
    %85 = arith.addf %83, %84 : vector<1x128xf32>
    %c0_37 = arith.constant 0 : index
    %c7_38 = arith.constant 7 : index
    %c0_39 = arith.constant 0 : index
    %86 = vector.load %arg5[%c0_37, %c7_38, %c0_39] : memref<1x8x128xf32, #tpu.memory_space<vmem>>, vector<1x1x128xf32>
    %87 = vector.shape_cast %86 : vector<1x1x128xf32> to vector<1x128xf32>
    %88 = vector.shape_cast %85 : vector<1x128xf32> to vector<1x1x128xf32>
    tpu.vector_store %arg5[%c0_37, %c7_38, %c0_39], %88 {strides = array<i32>} : memref<1x8x128xf32, #tpu.memory_space<vmem>>, vector<1x1x128xf32>,
    return
  }
  func.func @transform_0(%arg0: i32, %arg1: i32, %arg2: memref<2x8xi32, #tpu.memory_space<smem>>) -> (i32, i32) {
    %c0_i32 = arith.constant 0 : i32
    %c0_i32_0 = arith.constant 0 : i32
    %c0_i32_1 = arith.constant 0 : i32
    return %c0_i32, %c0_i32_0 : i32, i32
  }
  func.func @transform_1(%arg0: i32, %arg1: i32, %arg2: memref<2x8xi32, #tpu.memory_space<smem>>) -> (i32, i32) {
    %c0_i32 = arith.constant 0 : i32
    %c0_i32_0 = arith.constant 0 : i32
    return %arg0, %c0_i32 : i32, i32
  }
  func.func @transform_2(%arg0: i32, %arg1: i32, %arg2: memref<2x8xi32, #tpu.memory_space<smem>>) -> (i32, i32, i32) {
    %c0_i32 = arith.constant 0 : i32
    %c0_i32_0 = arith.constant 0 : i32
    return %arg1, %arg0, %c0_i32 : i32, i32, i32
  }
}

</mosaic_0001>

<llo_original>
// kernel: tpu_custom_call.1
$region0: #{tpu_custom_call.1}
  #allocation0 [shape = 'u32[]', space=smem, size = 0x4, offset = 0x4, fixed_abs, tag = 'smem constant byte address 0x4 - core index']
  #allocation1 [shape = 'u32[72,128]{1,0:T(1,128)}', space=vmem, size = 0x9000, scoped, tag = 'internal scratch']
  #allocation2 [shape = 's32[1]{0}', space=sflag, size = 0x4, scoped, tag = 'scoped memory for tpu_custom_call.1']
  #allocation3 [shape = 'u8[1024]{0}', space=smem, size = 0x400, scoped, tag = 'prefetched SMEM operand 0']
  %s0 = inlined_call_operand.hbm [shape: s32[2,8], index: 0, kind: input, shape index: {}]
  %s1 = inlined_call_operand.hbm [shape: f32[64,128], index: 1, kind: input, shape index: {}]
  %s2 = inlined_call_operand.hbm [shape: f32[8,128], index: 2, kind: input, shape index: {}]
  %s3 = inlined_call_operand.hbm [shape: f32[2,8,128], index: 3, kind: output, shape index: {}]
  %s4 = sld [smem:[#allocation0]]
  $region49: #{tpu_custom_call.1} parent=0
    _
  %s6 = ssub.s32 1, %s4
  %s7 = scalar_select 0, %s6, %s4
  %s9 = sshll.u32 %s0, 4
  %s10 = int_to_ptr.hbm [resolvable:$true] %s9
  %12 = dma.hbm_to_smem %s10, 32, [#allocation3], [#allocation2]
  %14 = dma.done [#allocation2], 32
  %15 = sfence
  $region1: #{tpu_custom_call.1} parent=0
    #allocation4 [shape = 'u8[32768]{0}', space=vmem, size = 0x8000, scoped, tag = 'input window, operand 1, single buffered']
    #allocation5 [shape = 's32[2]{0}', space=sflag, size = 0x8, scoped, tag = 'scoped memory for tpu_custom_call.1']
    #allocation6 [shape = 's32[2]{0}', space=sflag, size = 0x8, scoped, tag = 'scoped memory for tpu_custom_call.1']
    #allocation7 [shape = 'u8[4096]{0}', space=vmem, size = 0x1000, scoped, tag = 'input window, operand 2, single buffered']
    #allocation8 [shape = 's32[1]{0}', space=sflag, size = 0x4, scoped, tag = 'scoped memory for tpu_custom_call.1']
    #allocation9 [shape = 'u8[8192]{0}', space=vmem, size = 0x2000, scoped, tag = 'output window, operand 0']
    %16 = vsyncpa [#allocation5], 0
    %17 = vsyncpa [#allocation8], 0
    %18 = vsyncpa [#allocation6], 0
    %s19 = scalar_lea.sflag [#allocation6], 1
    %20 = vsyncpa %s19, 0
    loop: start=0, step=1, limit=4
    $region2: #{tpu_custom_call.1} parent=1 // loop_pre_header
      _
    $region3: #{tpu_custom_call.1} parent=1 // loop_header
      %s22 = sphi 0, %s26
      %p23 = scmp.ge.s32.totalorder %s22, 4
      %s29 = sphi 0, %s41
      %s30 = sphi 0, %s37
      %s31 = sphi 0, %s29
      %s32 = sphi 0, %s30
      %s33 = sphi 0, %s31
      %s34 = sphi 0, %s32
      %s42 = sphi 0, %s42
      %s44 = sphi 0, %s42
      %s45 = sphi 0, %s44
      %s59 = sphi 0, %s45
      %s65 = sphi 0, %s67
      %s68 = sphi 0, %s65
      %s69 = sphi 0, %s68
      %s85 = sphi 0, %s69
      %s93 = sphi 0, %s95
      %s96 = sphi 0, %s93
      %s97 = sphi 0, %s96
      %s113 = sphi 0, %s97
    $region4: #{tpu_custom_call.1} parent=1 // loop_header_branch
      %25 = sbr.rel (%p23) target = $region8
    $region5: #{tpu_custom_call.1} parent=1 // loop_body
      %s27 = ssub.s32 %s22, 1
      %s28 = ssub.s32 %s22, 2
      %s35 = sadd.s32 1, %s30
      %p36 = scmp.ge.s32.totalorder %s35, 2
      %s37 = scalar_select %p36, 0, %s35
      %s38 = sadd.s32 1, %s29
      %s39 = scalar_select %p36, %s38, %s29
      %p40 = scmp.ge.s32.totalorder %s39, 1
      %s41 = scalar_select %p40, 0, %s39
      %s43 = sadd.s32 %s42, 1
      %p46 = scmp.eq.s32.totalorder %s22, 1
      %p47 = scmp.ne.s32.totalorder %s42, %s44
      %p48 = scmp.eq.s32.totalorder %s22, 0
      %p49 = por %p47, %p48
      %p50 = scmp.ne.s32.totalorder %s42, %s44
      %p51 = scmp.eq.s32.totalorder %s27, 1
      %p52 = por %p50, %p51
      %p53 = scmp.ne.s32.totalorder %s44, %s45
      %p54 = scmp.eq.s32.totalorder %s27, 0
      %p55 = por %p53, %p54
      %p56 = scmp.ne.s32.totalorder %s44, %s45
      %p57 = scmp.eq.s32.totalorder %s28, 1
      %p58 = por %p56, %p57
      %p60 = scmp.ne.s32.totalorder %s45, %s59
      %p61 = scmp.eq.s32.totalorder %s28, 0
      %p62 = por %p60, %p61
      %s63 = ssub.s32 %s29, %s41
      %p64 = scmp.eq.s32.totalorder %s63, 0
      %s66 = sadd.s32 %s65, 1
      %s67 = scalar_select %p64, %s65, %s66
      %p70 = pneg %p64
      %p71 = scmp.eq.s32.totalorder %s22, 1
      %p72 = por %p70, %p71
      %p73 = scmp.ne.s32.totalorder %s65, %s68
      %p74 = scmp.eq.s32.totalorder %s22, 0
      %p75 = por %p73, %p74
      %p76 = scmp.ne.s32.totalorder %s65, %s68
      %p77 = scmp.eq.s32.totalorder %s27, 1
      %p78 = por %p76, %p77
      %p79 = scmp.ne.s32.totalorder %s68, %s69
      %p80 = scmp.eq.s32.totalorder %s27, 0
      %p81 = por %p79, %p80
      %p82 = scmp.ne.s32.totalorder %s68, %s69
      %p83 = scmp.eq.s32.totalorder %s28, 1
      %p84 = por %p82, %p83
      %p86 = scmp.ne.s32.totalorder %s69, %s85
      %p87 = scmp.eq.s32.totalorder %s28, 0
      %p88 = por %p86, %p87
      %s89 = ssub.s32 %s30, %s37
      %s90 = ssub.s32 %s29, %s41
      %s91 = sor.u32 %s89, %s90
      %p92 = scmp.eq.s32.totalorder %s91, 0
      %s94 = sadd.s32 %s93, 1
      %s95 = scalar_select %p92, %s93, %s94
      %p98 = pneg %p92
      %p99 = scmp.eq.s32.totalorder %s22, 1
      %p100 = por %p98, %p99
      %p101 = scmp.ne.s32.totalorder %s93, %s96
      %p102 = scmp.eq.s32.totalorder %s22, 0
      %p103 = por %p101, %p102
      %p104 = scmp.ne.s32.totalorder %s93, %s96
      %p105 = scmp.eq.s32.totalorder %s27, 1
      %p106 = por %p104, %p105
      %p107 = scmp.ne.s32.totalorder %s96, %s97
      %p108 = scmp.eq.s32.totalorder %s27, 0
      %p109 = por %p107, %p108
      %p110 = scmp.ne.s32.totalorder %s96, %s97
      %p111 = scmp.eq.s32.totalorder %s28, 1
      %p112 = por %p110, %p111
      %p114 = scmp.ne.s32.totalorder %s97, %s113
      %p115 = scmp.eq.s32.totalorder %s28, 0
      %p116 = por %p114, %p115
      %p117 = scmp.le.s32.totalorder 1, %s22
      %p118 = scmp.lt.s32.totalorder %s22, 3
      %p119 = pnand %p117, %p118
      %p120 = pneg %p119
      // Predicated region
      $region9: #{tpu_custom_call.1} parent=5 // pred_check
        _
      $region10: #{tpu_custom_call.1} parent=5 // pred_check_branch
        %122 = sbr.rel (%p119) target = $region12
      $region11: #{tpu_custom_call.1} parent=5 // pred_region
        %s123 = ssub.s32 %s22, 1
        // Predicated region
        $region13: #{tpu_custom_call.1} parent=11 // pred_check
          %p124 = pneg %p55
        $region14: #{tpu_custom_call.1} parent=11 // pred_check_branch
          %126 = sbr.rel (%p124) target = $region16
        $region15: #{tpu_custom_call.1} parent=11 // pred_region
          %128 = vsyncadd [#allocation5], 0
          %s129 = sshll.u32 %s1, 4
          %s130 = int_to_ptr.hbm [resolvable:$true] %s129
          %s131 = sshll.u32 [#allocation4], 4
          %s132 = int_to_ptr.vmem [resolvable:$true] %s131
          %137 = dma.hbm_to_vmem [thread:$0]  %s130, 1024, %s132, [#allocation5], 128, 128, 8
        $region16: #{tpu_custom_call.1} parent=11 // pred_fallthru
          _
        // Predicated region
        $region17: #{tpu_custom_call.1} parent=11 // pred_check
          %p138 = pneg %p81
        $region18: #{tpu_custom_call.1} parent=11 // pred_check_branch
          %140 = sbr.rel (%p138) target = $region20
        $region19: #{tpu_custom_call.1} parent=11 // pred_region
          %142 = vsyncadd [#allocation8], 0
          %s143 = smul.addr %s31, 8
          %s144 = scalar_lea.hbm %s2, %s143
          %s146 = sshll.u32 %s144, 4
          %s147 = int_to_ptr.hbm [resolvable:$true] %s146
          %s148 = sshll.u32 [#allocation7], 4
          %s149 = int_to_ptr.vmem [resolvable:$true] %s148
          %151 = dma.hbm_to_vmem [thread:$0]  %s147, 128, %s149, [#allocation8]
        $region20: #{tpu_custom_call.1} parent=11 // pred_fallthru
          _
      $region12: #{tpu_custom_call.1} parent=5 // pred_fallthru
        _
      %p152 = scmp.lt.s32.totalorder %s22, 2
      // Predicated region
      $region21: #{tpu_custom_call.1} parent=5 // pred_check
        %p153 = pneg %p152
      $region22: #{tpu_custom_call.1} parent=5 // pred_check_branch
        %155 = sbr.rel (%p153) target = $region24
      $region23: #{tpu_custom_call.1} parent=5 // pred_region
        _
      $region24: #{tpu_custom_call.1} parent=5 // pred_fallthru
        _
      %p156 = scmp.le.s32.totalorder 1, %s22
      %p157 = scmp.lt.s32.totalorder %s22, 3
      %p158 = pnand %p156, %p157
      %p159 = pneg %p158
      // Predicated region
      $region25: #{tpu_custom_call.1} parent=5 // pred_check
        _
      $region26: #{tpu_custom_call.1} parent=5 // pred_check_branch
        %161 = sbr.rel (%p158) target = $region28
      $region27: #{tpu_custom_call.1} parent=5 // pred_region
        %s162 = ssub.s32 %s22, 1
        // Predicated region
        $region29: #{tpu_custom_call.1} parent=27 // pred_check
          %p163 = pneg %p55
        $region30: #{tpu_custom_call.1} parent=27 // pred_check_branch
          %165 = sbr.rel (%p163) target = $region32
        $region31: #{tpu_custom_call.1} parent=27 // pred_region
          %167 = dma.done [#allocation5], 1024
        $region32: #{tpu_custom_call.1} parent=27 // pred_fallthru
          _
        // Predicated region
        $region33: #{tpu_custom_call.1} parent=27 // pred_check
          %p168 = pneg %p81
        $region34: #{tpu_custom_call.1} parent=27 // pred_check_branch
          %170 = sbr.rel (%p168) target = $region36
        $region35: #{tpu_custom_call.1} parent=27 // pred_region
          %172 = dma.done [#allocation8], 128
        $region36: #{tpu_custom_call.1} parent=27 // pred_fallthru
          _
        %p173 = pneg %p55
        %p174 = pneg %p52
        %p175 = pneg %p81
        %p176 = pneg %p78
        %p177 = pneg %p109
        %p178 = pneg %p106
        %s179 = sand.u32 %s96, 1
        %s180 = scalar_lea.sflag [#allocation6], %s179
        %s181 = sand.u32 %s96, 1
        %s182 = smul.addr %s181, 8
        %s183 = scalar_lea.vmem [#allocation9], %s182
        %s184 = smul.u32 %s31, 8
        %s185 = sshra.s32 %s184, 7
        %s186 = sand.u32 %s184, 127
        %s187 = sadd.s32 %s185, %s32
        %s188 = smul.u32 %s187, 128
        %s189 = sshra.s32 %s184, 7
        %s190 = sand.u32 %s184, 127
        %s191 = sadd.s32 %s188, %s190
        %s192 = sld [smem:[#allocation3 + %s191]]
        %s193 = scalar_lea.vmem [#allocation4], %s192
        %v194 = vld [vmem:[%s193] sm:$0x1]
        %v195 = vld [vmem:[#allocation7] sm:$0x1]
        %v196 = vadd.f32 %v194, %v195
        %197 = vst [vmem:[%s183] sm:$0x1] %v196
        %s198 = sadd.s32 %s184, 1
        %s199 = sshra.s32 %s198, 7
        %s200 = sand.u32 %s198, 127
        %s201 = sadd.s32 %s199, %s32
        %s202 = smul.u32 %s201, 128
        %s203 = sshra.s32 %s198, 7
        %s204 = sand.u32 %s198, 127
        %s205 = sadd.s32 %s202, %s204
        %s206 = sld [smem:[#allocation3 + %s205]]
        %s207 = scalar_lea.vmem [#allocation4], %s206
        %v208 = vld [vmem:[%s207] sm:$0x1]
        %v209 = vld [vmem:[#allocation7 + $0x1] sm:$0x1]
        %v210 = vadd.f32 %v208, %v209
        %211 = vst [vmem:[%s183 + $0x1] sm:$0x1] %v210
        %s212 = sadd.s32 %s184, 2
        %s213 = sshra.s32 %s212, 7
        %s214 = sand.u32 %s212, 127
        %s215 = sadd.s32 %s213, %s32
        %s216 = smul.u32 %s215, 128
        %s217 = sshra.s32 %s212, 7
        %s218 = sand.u32 %s212, 127
        %s219 = sadd.s32 %s216, %s218
        %s220 = sld [smem:[#allocation3 + %s219]]
        %s221 = scalar_lea.vmem [#allocation4], %s220
        %v222 = vld [vmem:[%s221] sm:$0x1]
        %v223 = vld [vmem:[#allocation7 + $0x2] sm:$0x1]
        %v224 = vadd.f32 %v222, %v223
        %225 = vst [vmem:[%s183 + $0x2] sm:$0x1] %v224
        %s226 = sadd.s32 %s184, 3
        %s227 = sshra.s32 %s226, 7
        %s228 = sand.u32 %s226, 127
        %s229 = sadd.s32 %s227, %s32
        %s230 = smul.u32 %s229, 128
        %s231 = sshra.s32 %s226, 7
        %s232 = sand.u32 %s226, 127
        %s233 = sadd.s32 %s230, %s232
        %s234 = sld [smem:[#allocation3 + %s233]]
        %s235 = scalar_lea.vmem [#allocation4], %s234
        %v236 = vld [vmem:[%s235] sm:$0x1]
        %v237 = vld [vmem:[#allocation7 + $0x3] sm:$0x1]
        %v238 = vadd.f32 %v236, %v237
        %239 = vst [vmem:[%s183 + $0x3] sm:$0x1] %v238
        %s240 = sadd.s32 %s184, 4
        %s241 = sshra.s32 %s240, 7
        %s242 = sand.u32 %s240, 127
        %s243 = sadd.s32 %s241, %s32
        %s244 = smul.u32 %s243, 128
        %s245 = sshra.s32 %s240, 7
        %s246 = sand.u32 %s240, 127
        %s247 = sadd.s32 %s244, %s246
        %s248 = sld [smem:[#allocation3 + %s247]]
        %s249 = scalar_lea.vmem [#allocation4], %s248
        %v250 = vld [vmem:[%s249] sm:$0x1]
        %v251 = vld [vmem:[#allocation7 + $0x4] sm:$0x1]
        %v252 = vadd.f32 %v250, %v251
        %253 = vst [vmem:[%s183 + $0x4] sm:$0x1] %v252
        %s254 = sadd.s32 %s184, 5
        %s255 = sshra.s32 %s254, 7
        %s256 = sand.u32 %s254, 127
        %s257 = sadd.s32 %s255, %s32
        %s258 = smul.u32 %s257, 128
        %s259 = sshra.s32 %s254, 7
        %s260 = sand.u32 %s254, 127
        %s261 = sadd.s32 %s258, %s260
        %s262 = sld [smem:[#allocation3 + %s261]]
        %s263 = scalar_lea.vmem [#allocation4], %s262
        %v264 = vld [vmem:[%s263] sm:$0x1]
        %v265 = vld [vmem:[#allocation7 + $0x5] sm:$0x1]
        %v266 = vadd.f32 %v264, %v265
        %267 = vst [vmem:[%s183 + $0x5] sm:$0x1] %v266
        %s268 = sadd.s32 %s184, 6
        %s269 = sshra.s32 %s268, 7
        %s270 = sand.u32 %s268, 127
        %s271 = sadd.s32 %s269, %s32
        %s272 = smul.u32 %s271, 128
        %s273 = sshra.s32 %s268, 7
        %s274 = sand.u32 %s268, 127
        %s275 = sadd.s32 %s272, %s274
        %s276 = sld [smem:[#allocation3 + %s275]]
        %s277 = scalar_lea.vmem [#allocation4], %s276
        %v278 = vld [vmem:[%s277] sm:$0x1]
        %v279 = vld [vmem:[#allocation7 + $0x6] sm:$0x1]
        %v280 = vadd.f32 %v278, %v279
        %281 = vst [vmem:[%s183 + $0x6] sm:$0x1] %v280
        %s282 = sadd.s32 %s184, 7
        %s283 = sshra.s32 %s282, 7
        %s284 = sand.u32 %s282, 127
        %s285 = sadd.s32 %s283, %s32
        %s286 = smul.u32 %s285, 128
        %s287 = sshra.s32 %s282, 7
        %s288 = sand.u32 %s282, 127
        %s289 = sadd.s32 %s286, %s288
        %s290 = sld [smem:[#allocation3 + %s289]]
        %s291 = scalar_lea.vmem [#allocation4], %s290
        %v292 = vld [vmem:[%s291] sm:$0x1]
        %v293 = vld [vmem:[#allocation7 + $0x7] sm:$0x1]
        %v294 = vadd.f32 %v292, %v293
        %295 = vst [vmem:[%s183 + $0x7] sm:$0x1] %v294
        %s296 = sand.u32 %s96, 1
        %s297 = scalar_lea.sflag [#allocation6], %s296
        %s298 = sand.u32 %s96, 1
        %s299 = smul.addr %s298, 8
        %s300 = scalar_lea.vmem [#allocation9], %s299
        // Predicated region
        $region37: #{tpu_custom_call.1} parent=27 // pred_check
          %p301 = pneg %p106
        $region38: #{tpu_custom_call.1} parent=27 // pred_check_branch
          %303 = sbr.rel (%p301) target = $region40
        $region39: #{tpu_custom_call.1} parent=27 // pred_region
          %305 = vsyncadd %s297, 0
          %s306 = sadd.s32 %s31, %s32
          %s307 = smul.addr %s306, 8
          %s308 = scalar_lea.hbm %s3, %s307
          %s310 = sshll.u32 %s300, 4
          %s311 = int_to_ptr.vmem [resolvable:$true] %s310
          %s312 = sshll.u32 %s308, 4
          %s313 = int_to_ptr.hbm [resolvable:$true] %s312
          %315 = dma.vmem_to_hbm [thread:$0]  %s311, 128, %s313, %s297
        $region40: #{tpu_custom_call.1} parent=27 // pred_fallthru
          _
      $region28: #{tpu_custom_call.1} parent=5 // pred_fallthru
        _
      %p316 = scmp.le.s32.totalorder 2, %s22
      // Predicated region
      $region41: #{tpu_custom_call.1} parent=5 // pred_check
        %p317 = pneg %p316
      $region42: #{tpu_custom_call.1} parent=5 // pred_check_branch
        %319 = sbr.rel (%p317) target = $region44
      $region43: #{tpu_custom_call.1} parent=5 // pred_region
        %s320 = ssub.s32 %s22, 2
        // Predicated region
        $region45: #{tpu_custom_call.1} parent=43 // pred_check
          %p321 = pneg %p112
        $region46: #{tpu_custom_call.1} parent=43 // pred_check_branch
          %323 = sbr.rel (%p321) target = $region48
        $region47: #{tpu_custom_call.1} parent=43 // pred_region
          %s324 = sand.u32 %s97, 1
          %s325 = scalar_lea.sflag [#allocation6], %s324
          %s326 = sand.u32 %s97, 1
          %s327 = smul.addr %s326, 8
          %s328 = scalar_lea.vmem [#allocation9], %s327
          %330 = dma.done %s325, 128
        $region48: #{tpu_custom_call.1} parent=43 // pred_fallthru
          _
      $region44: #{tpu_custom_call.1} parent=5 // pred_fallthru
        _
    $region6: #{tpu_custom_call.1} parent=1 // loop_footer
      %s26 = sadd.s32 1, %s22
    $region7: #{tpu_custom_call.1} parent=1 // loop_footer_branch
      %21 = sbr.rel target = $region3
    $region8: #{tpu_custom_call.1} parent=1 // loop_exit
      _
    %331 = vsyncpa [#allocation5], 1
    %s332 = scalar_lea.sflag [#allocation5], 1
    %333 = vsyncpa %s332, 1
    %334 = vsyncpa [#allocation8], 1
    %335 = vsyncpa [#allocation6], 1
    %s336 = scalar_lea.sflag [#allocation6], 1
    %337 = vsyncpa %s336, 1

</llo_original>
